<compile_context>
chip_gen: v7x
topology: tpu7x:2x2x1
jax: 0.10.0
libtpu: 0.0.40
codegen_flags: <defaults>
</compile_context>

<pallas_src>
import math

import jax
import jax.numpy as jnp
from jax import lax
from jax.experimental import pallas as pl
from jax.experimental.pallas import tpu as pltpu


def _identity_copy_kernel(x_ref, o_ref):
    # Pure pass-through: forward() of QModel_end_func returns x as-is.
    o_ref[...] = x_ref[...]


def _chip_tuning():
    """(tile_target_bytes, vmem_cap_bytes) chosen per chip generation."""
    try:
        kind = jax.devices()[0].device_kind.lower()
    except Exception:  # pragma: no cover - defensive, e.g. no devices yet
        kind = ""
    if "v7" in kind or "v6" in kind:
        # v6e ~1.4 TB/s, v7x ~3.2 TB/s per TC: 8 MiB tiles keep the ~0.35 us
        # per-step overhead under a few percent.  4*8 MiB + headroom = 34 MiB
        # fits v7x's 64 MiB physical VMEM with double-buffering.
        return 8 << 20, 48 << 20
    # v5e (~0.8 TB/s, 128 MiB VMEM but 16 MiB scoped default): modest tiles.
    return 4 << 20, 32 << 20


def _pallas_identity(x):
    """Materialized identity: lane-dense, aliased, chip-tuned tiled VMEM copy."""
    orig_shape = x.shape
    dtype = x.dtype
    itemsize = jnp.dtype(dtype).itemsize
    n = math.prod(orig_shape)

    tile_target_bytes, vmem_cap_bytes = _chip_tuning()

    LANE = 128
    SUB = max(1, 32 // itemsize)          # sublane quantum: 8 f32 / 16 bf16 / 32 i8

    # ---- lane-dense flat view: pad up to a multiple of 128 if needed -------
    x_flat = x.reshape(-1)
    pad = (-n) % LANE
    if pad:
        # Keep the output slab lane-dense (avoid masked vst.msk partial
        # stores); the tail is sliced off afterwards.
        x_flat = jnp.pad(x_flat, (0, pad))
    n_pad = n + pad

    # ---- choose columns c: large multiple of 128 dividing n_pad ------------
    MAX_ROW_BYTES = 64 * 1024             # cap a single row at 64 KiB
    max_c = max(LANE, (MAX_ROW_BYTES // itemsize) // LANE * LANE)
    c = LANE
    k = min(max_c, n_pad) // LANE
    while k >= 1:
        cand = LANE * k
        if n_pad % cand == 0:
            c = cand
            break
        k -= 1
    rows = n_pad // c
    x2d = x_flat.reshape(rows, c)

    # ---- tile rows: chip-tuned tile size, dtype-aware sublane multiple ------
    rows_per_tile = max(1, tile_target_bytes // (c * itemsize))
    if rows <= rows_per_tile:
        # Prefer >= 2 grid steps so v7x megacore ("parallel") can use both
        # TensorCores — but only when the split keeps full, unmasked tiles.
        if rows >= 2 * SUB and rows % (2 * SUB) == 0:
            row_tile = rows // 2
        else:
            row_tile = rows               # single full-extent block
    else:
        base = max(SUB, (rows_per_tile // SUB) * SUB)
        row_tile = base
        # Bounded search for a tile that divides rows evenly (no padded
        # partial last block → every step is unmasked, full-bandwidth).
        t = base
        steps = 0
        while t >= SUB and steps < 256:
            if rows % t == 0:
                row_tile = t
                break
            t -= SUB
            steps += 1
    grid = pl.cdiv(rows, row_tile)        # partial last tile still correct

    tile_bytes = row_tile * c * itemsize
    # 2 buffers x (in + out) + headroom, clamped per-chip.
    vmem_bytes = int(min(vmem_cap_bytes, max(8 << 20, 4 * tile_bytes + (2 << 20))))

    out2d = pl.pallas_call(
        _identity_copy_kernel,
        out_shape=jax.ShapeDtypeStruct((rows, c), dtype),
        grid_spec=pltpu.PrefetchScalarGridSpec(
            num_scalar_prefetch=0,
            grid=(grid,),
            in_specs=[pl.BlockSpec((row_tile, c), lambda i: (i, 0))],
            out_specs=pl.BlockSpec((row_tile, c), lambda i: (i, 0)),
        ),
        input_output_aliases={0: 0},      # identity: let XLA alias buffers
        compiler_params=pltpu.CompilerParams(
            dimension_semantics=("parallel",),
            vmem_limit_bytes=vmem_bytes,
        ),
        cost_estimate=pl.CostEstimate(
            flops=0, transcendentals=0, bytes_accessed=2 * n_pad * itemsize),
    )(x2d)

    out_flat = out2d.reshape(-1)
    if pad:
        out_flat = out_flat[:n]
    return out_flat.reshape(orig_shape)


def qmodel_end_forward(x, qx=None, sx=None, qgroup_size_lin=16,
                       is_training=True, materialize=False):
    """Pallas implementation of QModel_end.forward.

    x:  float activations, shape [B, S, H]
    qx: quantized activations (int8 / fp8 view) — unused in forward
    sx: per-group scales — unused in forward

    The forward is the identity on x in both training and eval mode.
      * materialize=False (default/hot path): jax.lax.optimization_barrier(x)
        — preserves an explicit op boundary (so a custom-VJP anchor is not
        silently dropped) with ZERO HBM traffic.
      * materialize=True: force a genuinely new buffer through the Pallas
        copy kernel (aliased, lane-dense, chip-tuned tiles).
    """
    del qx, sx, qgroup_size_lin, is_training  # forward is identity either way
    if not materialize:
        return lax.optimization_barrier(x)
    return _pallas_identity(x)


if __name__ == "__main__":
    key = jax.random.PRNGKey(0)
    B, S, H = 2, 8, 32
    qgroup_size = 16  # qargs.qgroup_size_lin analogue (1 x 16 group quantization)

    kx, kq = jax.random.split(key)
    x = jax.random.normal(kx, (B, S, H), dtype=jnp.float32)

    # Synthetic quantized companion tensors (unused by forward, but match the
    # module signature): int8 quantized x and per-group scales.
    qx = jax.random.randint(kq, (B, S, H), -128, 128, dtype=jnp.int8)
    sx = jnp.abs(x).reshape(B, S, H // qgroup_size, qgroup_size).max(axis=-1) / 127.0

    # Default fast path: optimization-barrier identity (zero HBM traffic).
    out_fast = qmodel_end_forward(x, qx, sx, qgroup_size_lin=qgroup_size)
    out_fast = jax.block_until_ready(out_fast)

    # Explicit Pallas kernel path (materialized new buffer), run once.
    out_kernel = qmodel_end_forward(x, qx, sx, qgroup_size_lin=qgroup_size,
                                    materialize=True)
    out_kernel = jax.block_until_ready(out_kernel)

    assert out_fast.shape == x.shape and out_fast.dtype == x.dtype
    assert out_kernel.shape == x.shape and out_kernel.dtype == x.dtype
    assert jnp.array_equal(out_fast, x)
    assert jnp.array_equal(out_kernel, x)
    print("KERNEL_OK")
</pallas_src>

<mosaic_0001>
module attributes {stable_mosaic.version = 11 : i64} {
  func.func @_identity_copy_kernel(%arg0: i32, %arg1: memref<1x512xf32, #tpu.memory_space<vmem>>, %arg2: memref<1x512xf32, #tpu.memory_space<vmem>>) attributes {dimension_semantics = [#tpu.dimension_semantics<parallel>], iteration_bounds = array<i64: 1>, scalar_prefetch = 0 : i64, scratch_operands = 0 : i64, tpu.core_type = #tpu.core_type<tc>, window_params = [{transform_indices = @transform_0, window_bounds = array<i64: 1, 512>}, {transform_indices = @transform_1, window_bounds = array<i64: 1, 512>}]} {
    %c0 = arith.constant 0 : index
    %c0_0 = arith.constant 0 : index
    %0 = vector.load %arg1[%c0, %c0_0] : memref<1x512xf32, #tpu.memory_space<vmem>>, vector<1x512xf32>
    %c0_1 = arith.constant 0 : index
    %c0_2 = arith.constant 0 : index
    %1 = vector.load %arg2[%c0_1, %c0_2] : memref<1x512xf32, #tpu.memory_space<vmem>>, vector<1x512xf32>
    tpu.vector_store %arg2[%c0_1, %c0_2], %0 {strides = array<i32>} : memref<1x512xf32, #tpu.memory_space<vmem>>, vector<1x512xf32>,
    return
  }
  func.func @transform_0(%arg0: i32) -> (i32, i32) {
    %c0_i32 = arith.constant 0 : i32
    %c0_i32_0 = arith.constant 0 : i32
    return %arg0, %c0_i32 : i32, i32
  }
  func.func @transform_1(%arg0: i32) -> (i32, i32) {
    %c0_i32 = arith.constant 0 : i32
    %c0_i32_0 = arith.constant 0 : i32
    return %arg0, %c0_i32 : i32, i32
  }
}

</mosaic_0001>

<llo_original>
// kernel: tpu_custom_call.1
$region0: #{tpu_custom_call.1}
  #allocation0 [shape = 'u32[]', space=smem, size = 0x4, offset = 0x4, fixed_abs, tag = 'smem constant byte address 0x4 - core index']
  #allocation1 [shape = 'u32[144,128]{1,0:T(1,128)}', space=vmem, size = 0x12000, scoped, tag = 'internal scratch']
  %s0 = inlined_call_operand.hbm [shape: f32[1,512], index: 0, kind: input, shape index: {}, may-alias: {0,1}]
  %s1 = inlined_call_operand.hbm [shape: f32[1,512], index: 1, kind: output, shape index: {}, may-alias: {0,1}]
  %s2 = sld [smem:[#allocation0]]
  $region18: #{tpu_custom_call.1} parent=0
    _
  %s4 = ssub.s32 1, %s2
  %s5 = scalar_select 0, %s4, %s2
  $region1: #{tpu_custom_call.1} parent=0
    #allocation2 [shape = 'u8[2048]{0}', space=vmem, size = 0x800, scoped, tag = 'input window, operand 0, single buffered']
    #allocation3 [shape = 's32[1]{0}', space=sflag, size = 0x4, scoped, tag = 'scoped memory for tpu_custom_call.1']
    #allocation4 [shape = 's32[1]{0}', space=sflag, size = 0x4, scoped, tag = 'scoped memory for tpu_custom_call.1']
    #allocation5 [shape = 'u8[2048]{0}', space=vmem, size = 0x800, scoped, tag = 'output window, operand 0, single buffered']
    %6 = vsyncpa [#allocation3], 0
    %7 = vsyncpa [#allocation4], 0
    // Predicated region
    $region2: #{tpu_custom_call.1} parent=1 // pred_check
      _
    $region3: #{tpu_custom_call.1} parent=1 // pred_check_branch
      %9 = sbr.rel (0) target = $region5
    $region4: #{tpu_custom_call.1} parent=1 // pred_region
      %s11 = ssub.s32 64, 64
      %12 = vsyncadd [#allocation3], %s11
      %s14 = sshll.u32 [#allocation2], 4
      %s15 = int_to_ptr.vmem [resolvable:$true] %s14
      %17 = dma.hbm_to_vmem [thread:$0]  %s0, 64, %s15, [#allocation3]
    $region5: #{tpu_custom_call.1} parent=1 // pred_fallthru
      _
    // Predicated region
    $region6: #{tpu_custom_call.1} parent=1 // pred_check
      _
    $region7: #{tpu_custom_call.1} parent=1 // pred_check_branch
      %19 = sbr.rel (0) target = $region9
    $region8: #{tpu_custom_call.1} parent=1 // pred_region
      %20 = dma.done [#allocation3], 64
    $region9: #{tpu_custom_call.1} parent=1 // pred_fallthru
      _
    %v21 = vld [vmem:[#allocation2] sm:$0xf]
    %v22 = vlaneseq
    %vm23 = vcmp.ge.s32.totalorder %v22, 0
    %vm24 = vcmp.lt.s32.totalorder %v22, 512
    %vm25 = vmand %vm23, %vm24
    %26 = vst.msk [vmem:[#allocation5] sm:$0xf] %vm25, %v21
    // Predicated region
    $region10: #{tpu_custom_call.1} parent=1 // pred_check
      _
    $region11: #{tpu_custom_call.1} parent=1 // pred_check_branch
      %28 = sbr.rel (0) target = $region13
    $region12: #{tpu_custom_call.1} parent=1 // pred_region
      %s30 = ssub.s32 64, 64
      %31 = vsyncadd [#allocation4], %s30
      %s33 = sshll.u32 [#allocation5], 4
      %s34 = int_to_ptr.vmem [resolvable:$true] %s33
      %36 = dma.vmem_to_hbm [thread:$0]  %s34, 64, %s1, [#allocation4]
    $region13: #{tpu_custom_call.1} parent=1 // pred_fallthru
      _
    // Predicated region
    $region14: #{tpu_custom_call.1} parent=1 // pred_check
      _
    $region15: #{tpu_custom_call.1} parent=1 // pred_check_branch
      %38 = sbr.rel (0) target = $region17
    $region16: #{tpu_custom_call.1} parent=1 // pred_region
      %39 = dma.done [#allocation4], 64
    $region17: #{tpu_custom_call.1} parent=1 // pred_fallthru
      _
    %40 = vsyncpa [#allocation3], 1
    %41 = vsyncpa [#allocation4], 1

</llo_original>
